<compile_context>
chip_gen: v7x
topology: tpu7x:2x2x1
jax: 0.10.0
libtpu: 0.0.40
codegen_flags: <defaults>
</compile_context>

<pallas_src>
import functools
import math

import jax
import jax.numpy as jnp
from jax.experimental import pallas as pl
from jax.experimental.pallas import tpu as pltpu

_MXU_ALIGN = 256  # v6e/v7x MXU tile; also a multiple of the v5e 128 tile.


def _act(name, x):
    """Activation in f32 (relu / gelu / tanh from ACT2FN, plus silu)."""
    if name == "relu":
        return jnp.maximum(x, 0.0)
    if name == "gelu":
        # tanh-approximate GELU (see TODO at top of file).
        c = math.sqrt(2.0 / math.pi)
        return 0.5 * x * (1.0 + jnp.tanh(c * (x + 0.044715 * x * x * x)))
    if name == "tanh":
        return jnp.tanh(x)
    if name == "silu":
        return x / (1.0 + jnp.exp(-x))
    raise ValueError(f"unsupported hidden_act: {name}")


def _mlp_kernel(x_ref, wg_ref, wu_ref, wdt_ref, o_ref, acc_ref, *, act_name):
    # x_ref  : (TM, H)  token tile (revisited across the k axis -> DMA'd once per i)
    # wg_ref : (TI, H)  gate_proj.weight stripe k   (PyTorch (out, in) layout)
    # wu_ref : (TI, H)  up_proj.weight   stripe k
    # wdt_ref: (TI, H)  down_proj.weight^T stripe k (pre-transposed in wrapper)
    # o_ref  : (TM, H)  output tile
    # acc_ref: (TM, H)  f32 accumulator scratch
    k = pl.program_id(1)

    @pl.when(k == 0)
    def _():
        acc_ref[...] = jnp.zeros_like(acc_ref)

    x = x_ref[...]
    # Contract the last dim of both operands (A @ B^T, the flash-attention
    # q @ k^T pattern) -> no transpose is materialized for the (TI, H) weights.
    dn_t = (((1,), (1,)), ((), ()))
    gate = jax.lax.dot_general(x, wg_ref[...], dimension_numbers=dn_t,
                               preferred_element_type=jnp.float32)
    up = jax.lax.dot_general(x, wu_ref[...], dimension_numbers=dn_t,
                             preferred_element_type=jnp.float32)
    h = (_act(act_name, gate) * up).astype(x.dtype)            # (TM, TI)

    # down_proj weight was pre-transposed to (I, H): canonical (M,K)@(K,N).
    dn_c = (((1,), (0,)), ((), ()))
    acc_ref[...] += jax.lax.dot_general(h, wdt_ref[...], dimension_numbers=dn_c,
                                        preferred_element_type=jnp.float32)

    @pl.when(k == pl.num_programs(1) - 1)
    def _():
        o_ref[...] = acc_ref[...].astype(o_ref.dtype)  # single lane-dense store


def _vmem_limit_bytes():
    """Generation-aware scoped-VMEM limit (~3/4 of physical VMEM)."""
    cap = 64 << 20  # conservative default (v7x per-TensorCore VMEM)
    try:
        info = pltpu.get_tpu_info()
        cap = int(getattr(info, "vmem_capacity_bytes", cap)) or cap
    except Exception:
        pass
    return int(min(max(cap * 3 // 4, 32 << 20), 112 << 20))


def _choose_tile_i(inter, hidden, w_itemsize, budget):
    """Largest I-stripe whose three DOUBLE-BUFFERED (TI, H) weight blocks fit
    within ~half the VMEM budget; must divide I and be MXU/sublane aligned."""
    cap = max((budget // 2) // (6 * hidden * w_itemsize), 8)
    if inter <= cap:
        return inter
    for align in (256, 128, 8):
        d = (min(cap, inter) // align) * align
        while d >= align:
            if inter % d == 0:
                return d
            d -= align
    return inter  # no aligned divisor: fall back to the full I per step


def _choose_tile_m(n_tokens, hidden, ti, x_itemsize, budget, weight_bytes):
    """Token-tile height: as large as the remaining VMEM budget allows, MXU
    aligned, >= 2 tiles when N is large (v7x megacore), preferring a tile
    that divides N so the wrapper never has to jnp.pad the activations."""
    avail = max(budget - weight_bytes, 1 << 20)
    # per token row: double-buffered x + out blocks (native dtype), the f32
    # accumulator row, and the f32 gate/up/h temporaries of width TI.
    per_row = 2 * 2 * hidden * x_itemsize + 4 * hidden + 3 * 4 * ti
    tm = int(min(avail // per_row, 1024))
    if n_tokens >= 2 * _MXU_ALIGN:            # keep both v7x TensorCores busy
        tm = min(tm, ((n_tokens // 2) // _MXU_ALIGN) * _MXU_ALIGN)
    if n_tokens <= max(tm, 8):
        return n_tokens                       # single full block, no padding
    align = _MXU_ALIGN if tm >= _MXU_ALIGN else (128 if tm >= 128 else 8)
    tm = max(align, (tm // align) * align)
    if n_tokens % tm != 0:
        cand = tm
        while cand >= max(align, tm - 4 * align):
            if n_tokens % cand == 0:
                return cand                   # divides N -> no wrapper pad
            cand -= align
    return tm


def deepseek_mlp(x, gate_w, up_w, down_w, *, hidden_act="gelu",
                 tile_m=None, tile_i=None, compute_dtype=None):
    """Eval-mode DeepseekMLP forward.

    x:      (..., hidden)
    gate_w: (intermediate, hidden)   -- nn.Linear weight layout
    up_w:   (intermediate, hidden)
    down_w: (hidden, intermediate)
    compute_dtype: optionally cast activations/weights (e.g. jnp.bfloat16) for
                   a faster MXU path; output keeps x.dtype.
    """
    orig_shape = x.shape
    out_dtype = x.dtype
    hidden = orig_shape[-1]
    inter = gate_w.shape[0]
    assert gate_w.shape == (inter, hidden)
    assert up_w.shape == (inter, hidden)
    assert down_w.shape == (hidden, inter)

    flat = x.reshape(-1, hidden)
    # One-time layout fix: stream down_proj's weight as contiguous (TI, H) row
    # stripes instead of strided (H, TI) column slabs.  Production callers
    # should store the pre-transposed weight to avoid this per-call transpose.
    down_wt = down_w.T

    if compute_dtype is not None:
        flat = flat.astype(compute_dtype)
        gate_w = gate_w.astype(compute_dtype)
        up_w = up_w.astype(compute_dtype)
        down_wt = down_wt.astype(compute_dtype)

    n_tokens = flat.shape[0]
    x_itemsize = jnp.dtype(flat.dtype).itemsize
    w_itemsize = jnp.dtype(gate_w.dtype).itemsize

    vmem_limit = _vmem_limit_bytes()
    budget = vmem_limit - (4 << 20)           # headroom for Mosaic internals

    ti = tile_i if tile_i is not None else _choose_tile_i(
        inter, hidden, w_itemsize, budget)
    assert inter % ti == 0, "tile_i must divide intermediate_size"
    weight_bytes = 3 * 2 * ti * hidden * w_itemsize   # 3 stripes, 2-deep buffered
    tm = tile_m if tile_m is not None else _choose_tile_m(
        n_tokens, hidden, ti, x_itemsize, budget, weight_bytes)

    n_pad = pl.cdiv(n_tokens, tm) * tm
    if n_pad != n_tokens:
        # Last-resort ragged handling; padded rows are zeros (act(0)*0 == 0)
        # and are sliced off below.
        flat = jnp.pad(flat, ((0, n_pad - n_tokens), (0, 0)))

    n_m = n_pad // tm
    n_k = inter // ti

    kernel = functools.partial(_mlp_kernel, act_name=hidden_act)

    flops = 6 * n_pad * hidden * inter
    transcendentals = 0 if hidden_act == "relu" else n_pad * inter
    bytes_accessed = (2 * n_pad * hidden * x_itemsize            # x in + out
                      + n_m * 3 * inter * hidden * w_itemsize)   # streamed weights

    out = pl.pallas_call(
        kernel,
        out_shape=jax.ShapeDtypeStruct((n_pad, hidden), out_dtype),
        grid=(n_m, n_k),
        in_specs=[
            pl.BlockSpec((tm, hidden), lambda i, k: (i, 0)),   # x tile
            pl.BlockSpec((ti, hidden), lambda i, k: (k, 0)),   # gate stripe
            pl.BlockSpec((ti, hidden), lambda i, k: (k, 0)),   # up stripe
            pl.BlockSpec((ti, hidden), lambda i, k: (k, 0)),   # down^T stripe
        ],
        out_specs=pl.BlockSpec((tm, hidden), lambda i, k: (i, 0)),
        scratch_shapes=[pltpu.VMEM((tm, hidden), jnp.float32)],
        compiler_params=pltpu.CompilerParams(
            dimension_semantics=("parallel", "arbitrary"),
            vmem_limit_bytes=vmem_limit),
        cost_estimate=pl.CostEstimate(
            flops=flops, transcendentals=transcendentals,
            bytes_accessed=bytes_accessed),
    )(flat, gate_w, up_w, down_wt)

    return out[:n_tokens].reshape(orig_shape)


def _init_linear_weight(key, out_features, in_features):
    # torch kaiming_uniform_(a=sqrt(5)) on an (out, in) weight: bound = 1/sqrt(fan_in)
    bound = 1.0 / math.sqrt(in_features)
    return jax.random.uniform(key, (out_features, in_features),
                              dtype=jnp.float32, minval=-bound, maxval=bound)


if __name__ == "__main__":
    # Small config: hidden_size=32, intermediate_size=64, hidden_act='gelu'
    bsz, seq_len, hidden_dim, inter_dim = 2, 8, 32, 64
    hidden_act = "gelu"

    key = jax.random.PRNGKey(0)
    k_x, k_g, k_u, k_d = jax.random.split(key, 4)
    x = jax.random.normal(k_x, (bsz, seq_len, hidden_dim), dtype=jnp.float32)
    gate_w = _init_linear_weight(k_g, inter_dim, hidden_dim)
    up_w = _init_linear_weight(k_u, inter_dim, hidden_dim)
    down_w = _init_linear_weight(k_d, hidden_dim, inter_dim)

    # Pure-JAX reference (same math, same activation formula).
    flat = x.reshape(-1, hidden_dim)
    ref = (_act(hidden_act, flat @ gate_w.T) * (flat @ up_w.T)) @ down_w.T
    ref = ref.reshape(x.shape)

    # 1) default (auto-chosen) tiles: single token tile, single I tile.
    out = deepseek_mlp(x, gate_w, up_w, down_w, hidden_act=hidden_act)
    jax.block_until_ready(out)
    assert out.shape == x.shape and out.dtype == x.dtype
    assert jnp.allclose(out, ref, atol=2e-2, rtol=2e-2), (
        "mismatch (default tiles): max abs diff = %g"
        % float(jnp.max(jnp.abs(out - ref))))

    # 2) forced small tiles to exercise the multi-tile reduction/accumulator
    #    path (2 token tiles x 2 intermediate stripes).
    out2 = deepseek_mlp(x, gate_w, up_w, down_w, hidden_act=hidden_act,
                        tile_m=8, tile_i=32)
    jax.block_until_ready(out2)
    assert jnp.allclose(out2, ref, atol=2e-2, rtol=2e-2), (
        "mismatch (tiled reduction): max abs diff = %g"
        % float(jnp.max(jnp.abs(out2 - ref))))

    print("KERNEL_OK")
</pallas_src>

<mosaic_0001>
module attributes {stable_mosaic.version = 11 : i64} {
  func.func @_mlp_kernel(%arg0: i32, %arg1: i32, %arg2: memref<16x32xf32, #tpu.memory_space<vmem>>, %arg3: memref<64x32xf32, #tpu.memory_space<vmem>>, %arg4: memref<64x32xf32, #tpu.memory_space<vmem>>, %arg5: memref<64x32xf32, #tpu.memory_space<vmem>>, %arg6: memref<16x32xf32, #tpu.memory_space<vmem>>, %arg7: memref<16x32xf32, #tpu.memory_space<vmem>>) attributes {dimension_semantics = [#tpu.dimension_semantics<parallel>, #tpu.dimension_semantics<arbitrary>], iteration_bounds = array<i64: 1, 1>, scalar_prefetch = 0 : i64, scratch_operands = 1 : i64, tpu.core_type = #tpu.core_type<tc>, window_params = [{transform_indices = @transform_0, window_bounds = array<i64: 16, 32>}, {transform_indices = @transform_1, window_bounds = array<i64: 64, 32>}, {transform_indices = @transform_2, window_bounds = array<i64: 64, 32>}, {transform_indices = @transform_3, window_bounds = array<i64: 64, 32>}, {transform_indices = @transform_4, window_bounds = array<i64: 16, 32>}]} {
    %c0_i32 = arith.constant 0 : i32
    %0 = arith.cmpi eq, %arg1, %c0_i32 : i32
    %1 = arith.extui %0 : i1 to i32
    %c0_i32_0 = arith.constant 0 : i32
    %2 = arith.cmpi ne, %1, %c0_i32_0 : i32
    scf.if %2 {
      %cst_20 = arith.constant 0.000000e+00 : f32
      %30 = vector.broadcast %cst_20 : f32 to vector<16x32xf32>
      %c0_21 = arith.constant 0 : index
      %c0_22 = arith.constant 0 : index
      %31 = vector.load %arg7[%c0_21, %c0_22] : memref<16x32xf32, #tpu.memory_space<vmem>>, vector<16x32xf32>
      tpu.vector_store %arg7[%c0_21, %c0_22], %30 {strides = array<i32>} : memref<16x32xf32, #tpu.memory_space<vmem>>, vector<16x32xf32>,
    } else {
    }
    %c0 = arith.constant 0 : index
    %c0_1 = arith.constant 0 : index
    %3 = vector.load %arg2[%c0, %c0_1] : memref<16x32xf32, #tpu.memory_space<vmem>>, vector<16x32xf32>
    %c0_2 = arith.constant 0 : index
    %c0_3 = arith.constant 0 : index
    %4 = vector.load %arg3[%c0_2, %c0_3] : memref<64x32xf32, #tpu.memory_space<vmem>>, vector<64x32xf32>
    %cst = arith.constant dense<0.000000e+00> : vector<16x64xf32>
    %5 = tpu.matmul %3, %4, %cst {dimension_numbers = #tpu.dot_dimension_numbers<[1], [1], [0], [0], [0, 0, 1, 0], [], []>} : vector<16x32xf32>, vector<64x32xf32>, vector<16x64xf32> -> vector<16x64xf32>
    %c0_4 = arith.constant 0 : index
    %c0_5 = arith.constant 0 : index
    %6 = vector.load %arg4[%c0_4, %c0_5] : memref<64x32xf32, #tpu.memory_space<vmem>>, vector<64x32xf32>
    %cst_6 = arith.constant dense<0.000000e+00> : vector<16x64xf32>
    %7 = tpu.matmul %3, %6, %cst_6 {dimension_numbers = #tpu.dot_dimension_numbers<[1], [1], [0], [0], [0, 0, 1, 0], [], []>} : vector<16x32xf32>, vector<64x32xf32>, vector<16x64xf32> -> vector<16x64xf32>
    %cst_7 = arith.constant 5.000000e-01 : f32
    %8 = vector.broadcast %cst_7 : f32 to vector<16x64xf32>
    %9 = arith.mulf %8, %5 : vector<16x64xf32>
    %cst_8 = arith.constant 4.471500e-02 : f32
    %10 = vector.broadcast %cst_8 : f32 to vector<16x64xf32>
    %11 = arith.mulf %10, %5 : vector<16x64xf32>
    %12 = arith.mulf %11, %5 : vector<16x64xf32>
    %13 = arith.mulf %12, %5 : vector<16x64xf32>
    %14 = arith.addf %5, %13 : vector<16x64xf32>
    %cst_9 = arith.constant 0.797884583 : f32
    %15 = vector.broadcast %cst_9 : f32 to vector<16x64xf32>
    %16 = arith.mulf %15, %14 : vector<16x64xf32>
    %17 = math.tanh %16 : vector<16x64xf32>
    %cst_10 = arith.constant 1.000000e+00 : f32
    %18 = vector.broadcast %cst_10 : f32 to vector<16x64xf32>
    %19 = arith.addf %18, %17 : vector<16x64xf32>
    %20 = arith.mulf %9, %19 : vector<16x64xf32>
    %21 = arith.mulf %20, %7 : vector<16x64xf32>
    %c0_11 = arith.constant 0 : index
    %c0_12 = arith.constant 0 : index
    %22 = vector.load %arg7[%c0_11, %c0_12] : memref<16x32xf32, #tpu.memory_space<vmem>>, vector<16x32xf32>
    %c0_13 = arith.constant 0 : index
    %c0_14 = arith.constant 0 : index
    %23 = vector.load %arg5[%c0_13, %c0_14] : memref<64x32xf32, #tpu.memory_space<vmem>>, vector<64x32xf32>
    %cst_15 = arith.constant dense<0.000000e+00> : vector<16x32xf32>
    %24 = tpu.matmul %21, %23, %cst_15 {dimension_numbers = #tpu.dot_dimension_numbers<[1], [0], [0], [1], [0, 0, 1, 1], [], []>} : vector<16x64xf32>, vector<64x32xf32>, vector<16x32xf32> -> vector<16x32xf32>
    %25 = arith.addf %22, %24 : vector<16x32xf32>
    %c0_16 = arith.constant 0 : index
    %c0_17 = arith.constant 0 : index
    %26 = vector.load %arg7[%c0_16, %c0_17] : memref<16x32xf32, #tpu.memory_space<vmem>>, vector<16x32xf32>
    tpu.vector_store %arg7[%c0_16, %c0_17], %25 {strides = array<i32>} : memref<16x32xf32, #tpu.memory_space<vmem>>, vector<16x32xf32>,
    %c0_i32_18 = arith.constant 0 : i32
    %27 = arith.cmpi eq, %arg1, %c0_i32_18 : i32
    %28 = arith.extui %27 : i1 to i32
    %c0_i32_19 = arith.constant 0 : i32
    %29 = arith.cmpi ne, %28, %c0_i32_19 : i32
    scf.if %29 {
      %c0_20 = arith.constant 0 : index
      %c0_21 = arith.constant 0 : index
      %30 = vector.load %arg7[%c0_20, %c0_21] : memref<16x32xf32, #tpu.memory_space<vmem>>, vector<16x32xf32>
      %c0_22 = arith.constant 0 : index
      %c0_23 = arith.constant 0 : index
      %31 = vector.load %arg6[%c0_22, %c0_23] : memref<16x32xf32, #tpu.memory_space<vmem>>, vector<16x32xf32>
      tpu.vector_store %arg6[%c0_22, %c0_23], %30 {strides = array<i32>} : memref<16x32xf32, #tpu.memory_space<vmem>>, vector<16x32xf32>,
    } else {
    }
    return
  }
  func.func @transform_0(%arg0: i32, %arg1: i32) -> (i32, i32) {
    %c0_i32 = arith.constant 0 : i32
    %c0_i32_0 = arith.constant 0 : i32
    return %arg0, %c0_i32 : i32, i32
  }
  func.func @transform_1(%arg0: i32, %arg1: i32) -> (i32, i32) {
    %c0_i32 = arith.constant 0 : i32
    %c0_i32_0 = arith.constant 0 : i32
    return %arg1, %c0_i32 : i32, i32
  }
  func.func @transform_2(%arg0: i32, %arg1: i32) -> (i32, i32) {
    %c0_i32 = arith.constant 0 : i32
    %c0_i32_0 = arith.constant 0 : i32
    return %arg1, %c0_i32 : i32, i32
  }
  func.func @transform_3(%arg0: i32, %arg1: i32) -> (i32, i32) {
    %c0_i32 = arith.constant 0 : i32
    %c0_i32_0 = arith.constant 0 : i32
    return %arg1, %c0_i32 : i32, i32
  }
  func.func @transform_4(%arg0: i32, %arg1: i32) -> (i32, i32) {
    %c0_i32 = arith.constant 0 : i32
    %c0_i32_0 = arith.constant 0 : i32
    return %arg0, %c0_i32 : i32, i32
  }
}

</mosaic_0001>

<llo_original>
// kernel: tpu_custom_call.1
$region0: #{tpu_custom_call.1}
  #allocation0 [shape = 'u32[]', space=smem, size = 0x4, offset = 0x4, fixed_abs, tag = 'smem constant byte address 0x4 - core index']
  #allocation1 [shape = 'u32[144,128]{1,0:T(1,128)}', space=vmem, size = 0x12000, scoped, tag = 'internal scratch']
  #allocation2 [shape = 'f32[16,32]{1,0:T(8,128)}', space=vmem, size = 0x2000, scoped, tag = 'scratch operand']
  %s0 = inlined_call_operand.vmem [shape: f32[16,32], index: 0, kind: input, shape index: {}]
  %s1 = inlined_call_operand.vmem [shape: f32[64,32], index: 1, kind: input, shape index: {}]
  %s2 = inlined_call_operand.vmem [shape: f32[64,32], index: 2, kind: input, shape index: {}]
  %s3 = inlined_call_operand.vmem [shape: f32[64,32], index: 3, kind: input, shape index: {}]
  %s4 = inlined_call_operand.hbm [shape: f32[16,32], index: 4, kind: output, shape index: {}]
  %s5 = sld [smem:[#allocation0]]
  $region34: #{tpu_custom_call.1} parent=0
    _
  %s7 = ssub.s32 1, %s5
  %s8 = scalar_select 0, %s7, %s5
  $region1: #{tpu_custom_call.1} parent=0
    #allocation3 [shape = 'u8[8192]{0}', space=vmem, size = 0x2000, scoped, tag = 'output window, operand 0, single buffered']
    #allocation4 [shape = 's32[1]{0}', space=sflag, size = 0x4, scoped, tag = 'scoped memory for tpu_custom_call.1']
    %9 = vsyncpa [#allocation4], 0
    // Predicated region
    $region2: #{tpu_custom_call.1} parent=1 // pred_check
      _
    $region3: #{tpu_custom_call.1} parent=1 // pred_check_branch
      %11 = sbr.rel (0) target = $region5
    $region4: #{tpu_custom_call.1} parent=1 // pred_region
      _
    $region5: #{tpu_custom_call.1} parent=1 // pred_fallthru
      _
    // Predicated region
    $region6: #{tpu_custom_call.1} parent=1 // pred_check
      _
    $region7: #{tpu_custom_call.1} parent=1 // pred_check_branch
      %13 = sbr.rel (0) target = $region9
    $region8: #{tpu_custom_call.1} parent=1 // pred_region
      _
    $region9: #{tpu_custom_call.1} parent=1 // pred_fallthru
      _
    // Predicated region
    $region10: #{tpu_custom_call.1} parent=1 // pred_check
      _
    $region11: #{tpu_custom_call.1} parent=1 // pred_check_branch
      %15 = sbr.rel (0) target = $region13
    $region12: #{tpu_custom_call.1} parent=1 // pred_region
      _
    $region13: #{tpu_custom_call.1} parent=1 // pred_fallthru
      _
    // Predicated region
    $region14: #{tpu_custom_call.1} parent=1 // pred_check
      _
    $region15: #{tpu_custom_call.1} parent=1 // pred_check_branch
      %17 = sbr.rel (0) target = $region17
    $region16: #{tpu_custom_call.1} parent=1 // pred_region
      _
    $region17: #{tpu_custom_call.1} parent=1 // pred_fallthru
      _
    %p18 = scmp.eq.s32.totalorder 0, 0
    // Predicated region
    $region18: #{tpu_custom_call.1} parent=1 // pred_check
      %p19 = pneg %p18
    $region19: #{tpu_custom_call.1} parent=1 // pred_check_branch
      %21 = sbr.rel (%p19) target = $region21
    $region20: #{tpu_custom_call.1} parent=1 // pred_region
      %vm22 = vcmask 261120
      %23 = vst.msk [vmem:[#allocation2] sm:$0xff] %vm22, 0.0
      %24 = vst.msk [vmem:[#allocation2 + $0x8] sm:$0xff] %vm22, 0.0
    $region21: #{tpu_custom_call.1} parent=1 // pred_fallthru
      _
    %v25 = vld [vmem:[%s0] sm:$0xff]
    %v26 = vld [vmem:[%s0 + $0x8] sm:$0xff]
    %v27 = vld [vmem:[%s1] sm:$0xff]
    %v28 = vld [vmem:[%s1 + $0x8] sm:$0xff]
    %v29 = vld [vmem:[%s1 + $0x10] sm:$0xff]
    %v30 = vld [vmem:[%s1 + $0x18] sm:$0xff]
    %v31 = vld [vmem:[%s1 + $0x20] sm:$0xff]
    %v32 = vld [vmem:[%s1 + $0x28] sm:$0xff]
    %v33 = vld [vmem:[%s1 + $0x30] sm:$0xff]
    %v34 = vld [vmem:[%s1 + $0x38] sm:$0xff]
    %vm35 = vcmask 261120
    %v37 = vsel %vm35, %v25, 0
    %v40 = vsel %vm35, %v26, 0
    %v43 = vsel %vm35, %v27, 0
    %v46 = vsel %vm35, %v28, 0
    %v49 = vsel %vm35, %v29, 0
    %v52 = vsel %vm35, %v30, 0
    %v55 = vsel %vm35, %v31, 0
    %v58 = vsel %vm35, %v32, 0
    %v61 = vsel %vm35, %v33, 0
    %v64 = vsel %vm35, %v34, 0
    %66 = vmatprep.subr.mxu0 0.0
    %67 = vmatpush1.xpose.msra.mxu0 %v43
    %68 = vmatprep.subr.mxu0 0.0
    %69 = vmatpush1.xpose.msra.mxu0 %v46
    %70 = vmatprep.subr.mxu0 0.0
    %71 = vmatpush1.xpose.msra.mxu0 %v49
    %72 = vmatprep.subr.mxu0 0.0
    %73 = vmatpush1.xpose.msra.mxu0 %v52
    %74 = vmatprep.subr.mxu0 0.0
    %75 = vmatpush1.xpose.msra.mxu0 %v55
    %76 = vmatprep.subr.mxu0 0.0
    %77 = vmatpush1.xpose.msra.mxu0 %v58
    %78 = vmatprep.subr.mxu0 0.0
    %79 = vmatpush1.xpose.msra.mxu0 %v61
    %80 = vmatprep.subr.mxu0 0.0
    %81 = vmatpush1.xpose.msra.mxu0 %v64
    %82 = vmatprep.subr.mxu0 0.0
    %83 = vmatpush1.xpose.msra.mxu0 0.0
    %84 = vmatprep.subr.mxu0 0.0
    %85 = vmatpush1.xpose.msra.mxu0 0.0
    %86 = vmatprep.subr.mxu0 0.0
    %87 = vmatpush1.xpose.msra.mxu0 0.0
    %88 = vmatprep.subr.mxu0 0.0
    %89 = vmatpush1.xpose.msra.mxu0 0.0
    %90 = vmatprep.subr.mxu0 0.0
    %91 = vmatpush1.xpose.msra.mxu0 0.0
    %92 = vmatprep.subr.mxu0 0.0
    %93 = vmatpush1.xpose.msra.mxu0 0.0
    %94 = vmatprep.subr.mxu0 0.0
    %95 = vmatpush1.xpose.msra.mxu0 0.0
    %96 = vmatprep.subr.mxu0 0.0
    %97 = vmatpush1.xpose.msra.mxu0 0.0
    %98 = vmatprep.subr.mxu0 0.0
    %99 = vmatpush1.xpose.msra.mxu0 0.0
    %100 = vmatprep.subr.mxu0 0.0
    %101 = vmatpush1.xpose.msra.mxu0 0.0
    %102 = vmatprep.subr.mxu0 0.0
    %103 = vmatpush1.xpose.msra.mxu0 0.0
    %104 = vmatprep.subr.mxu0 0.0
    %105 = vmatpush1.xpose.msra.mxu0 0.0
    %106 = vmatprep.subr.mxu0 0.0
    %107 = vmatpush1.xpose.msra.mxu0 0.0
    %108 = vmatprep.subr.mxu0 0.0
    %109 = vmatpush1.xpose.msra.mxu0 0.0
    %110 = vmatprep.subr.mxu0 0.0
    %111 = vmatpush1.xpose.msra.mxu0 0.0
    %112 = vmatprep.subr.mxu0 0.0
    %113 = vmatpush1.xpose.msra.mxu0 0.0
    %114 = vmatprep.subr.mxu0 0.0
    %115 = vmatpush1.xpose.msra.mxu0 0.0
    %116 = vmatprep.subr.mxu0 0.0
    %117 = vmatpush1.xpose.msra.mxu0 0.0
    %118 = vmatprep.subr.mxu0 0.0
    %119 = vmatpush1.xpose.msra.mxu0 0.0
    %120 = vmatprep.subr.mxu0 0.0
    %121 = vmatpush1.xpose.msra.mxu0 0.0
    %122 = vmatprep.subr.mxu0 0.0
    %123 = vmatpush1.xpose.msra.mxu0 0.0
    %124 = vmatprep.subr.mxu0 0.0
    %125 = vmatpush1.xpose.msra.mxu0 0.0
    %126 = vmatprep.subr.mxu0 0.0
    %127 = vmatpush1.xpose.msra.mxu0 0.0
    %128 = vmatprep.subr.mxu0 0.0
    %129 = vmatpush1.xpose.msra.mxu0 0.0
    %130 = vmatprep.mubr.f32.mxu0 0.0
    %131 = vmatmul.mubr.f32.gmra.mrb[0].mxu0 %v37
    %v132 = vpop.f32.mrb[0].mxu0
    %v133 = vadd.f32 0.0, %v132
    %v134 = vpop.f32.mrb[0].mxu0
    %135 = vmatprep.mubr.f32.mxu0 0.0
    %136 = vmatmul.mubr.f32.gmra.mrb[0].mxu0 %v40
    %v137 = vpop.f32.mrb[0].mxu0
    %v138 = vadd.f32 0.0, %v137
    %v139 = vpop.f32.mrb[0].mxu0
    %140 = vdwg.mxu0
    %v141 = vld [vmem:[%s2] sm:$0xff]
    %v142 = vld [vmem:[%s2 + $0x8] sm:$0xff]
    %v143 = vld [vmem:[%s2 + $0x10] sm:$0xff]
    %v144 = vld [vmem:[%s2 + $0x18] sm:$0xff]
    %v145 = vld [vmem:[%s2 + $0x20] sm:$0xff]
    %v146 = vld [vmem:[%s2 + $0x28] sm:$0xff]
    %v147 = vld [vmem:[%s2 + $0x30] sm:$0xff]
    %v148 = vld [vmem:[%s2 + $0x38] sm:$0xff]
    %v150 = vsel %vm35, %v141, 0
    %v153 = vsel %vm35, %v142, 0
    %v156 = vsel %vm35, %v143, 0
    %v159 = vsel %vm35, %v144, 0
    %v162 = vsel %vm35, %v145, 0
    %v165 = vsel %vm35, %v146, 0
    %v168 = vsel %vm35, %v147, 0
    %v171 = vsel %vm35, %v148, 0
    %173 = vmatprep.subr.mxu0 0.0
    %174 = vmatpush1.xpose.msra.mxu0 %v150
    %175 = vmatprep.subr.mxu0 0.0
    %176 = vmatpush1.xpose.msra.mxu0 %v153
    %177 = vmatprep.subr.mxu0 0.0
    %178 = vmatpush1.xpose.msra.mxu0 %v156
    %179 = vmatprep.subr.mxu0 0.0
    %180 = vmatpush1.xpose.msra.mxu0 %v159
    %181 = vmatprep.subr.mxu0 0.0
    %182 = vmatpush1.xpose.msra.mxu0 %v162
    %183 = vmatprep.subr.mxu0 0.0
    %184 = vmatpush1.xpose.msra.mxu0 %v165
    %185 = vmatprep.subr.mxu0 0.0
    %186 = vmatpush1.xpose.msra.mxu0 %v168
    %187 = vmatprep.subr.mxu0 0.0
    %188 = vmatpush1.xpose.msra.mxu0 %v171
    %189 = vmatprep.subr.mxu0 0.0
    %190 = vmatpush1.xpose.msra.mxu0 0.0
    %191 = vmatprep.subr.mxu0 0.0
    %192 = vmatpush1.xpose.msra.mxu0 0.0
    %193 = vmatprep.subr.mxu0 0.0
    %194 = vmatpush1.xpose.msra.mxu0 0.0
    %195 = vmatprep.subr.mxu0 0.0
    %196 = vmatpush1.xpose.msra.mxu0 0.0
    %197 = vmatprep.subr.mxu0 0.0
    %198 = vmatpush1.xpose.msra.mxu0 0.0
    %199 = vmatprep.subr.mxu0 0.0
    %200 = vmatpush1.xpose.msra.mxu0 0.0
    %201 = vmatprep.subr.mxu0 0.0
    %202 = vmatpush1.xpose.msra.mxu0 0.0
    %203 = vmatprep.subr.mxu0 0.0
    %204 = vmatpush1.xpose.msra.mxu0 0.0
    %205 = vmatprep.subr.mxu0 0.0
    %206 = vmatpush1.xpose.msra.mxu0 0.0
    %207 = vmatprep.subr.mxu0 0.0
    %208 = vmatpush1.xpose.msra.mxu0 0.0
    %209 = vmatprep.subr.mxu0 0.0
    %210 = vmatpush1.xpose.msra.mxu0 0.0
    %211 = vmatprep.subr.mxu0 0.0
    %212 = vmatpush1.xpose.msra.mxu0 0.0
    %213 = vmatprep.subr.mxu0 0.0
    %214 = vmatpush1.xpose.msra.mxu0 0.0
    %215 = vmatprep.subr.mxu0 0.0
    %216 = vmatpush1.xpose.msra.mxu0 0.0
    %217 = vmatprep.subr.mxu0 0.0
    %218 = vmatpush1.xpose.msra.mxu0 0.0
    %219 = vmatprep.subr.mxu0 0.0
    %220 = vmatpush1.xpose.msra.mxu0 0.0
    %221 = vmatprep.subr.mxu0 0.0
    %222 = vmatpush1.xpose.msra.mxu0 0.0
    %223 = vmatprep.subr.mxu0 0.0
    %224 = vmatpush1.xpose.msra.mxu0 0.0
    %225 = vmatprep.subr.mxu0 0.0
    %226 = vmatpush1.xpose.msra.mxu0 0.0
    %227 = vmatprep.subr.mxu0 0.0
    %228 = vmatpush1.xpose.msra.mxu0 0.0
    %229 = vmatprep.subr.mxu0 0.0
    %230 = vmatpush1.xpose.msra.mxu0 0.0
    %231 = vmatprep.subr.mxu0 0.0
    %232 = vmatpush1.xpose.msra.mxu0 0.0
    %233 = vmatprep.subr.mxu0 0.0
    %234 = vmatpush1.xpose.msra.mxu0 0.0
    %235 = vmatprep.subr.mxu0 0.0
    %236 = vmatpush1.xpose.msra.mxu0 0.0
    %237 = vmatprep.mubr.f32.mxu0 0.0
    %238 = vmatmul.mubr.f32.gmra.mrb[0].mxu0 %v37
    %v239 = vpop.f32.mrb[0].mxu0
    %v240 = vadd.f32 0.0, %v239
    %v241 = vpop.f32.mrb[0].mxu0
    %242 = vmatprep.mubr.f32.mxu0 0.0
    %243 = vmatmul.mubr.f32.gmra.mrb[0].mxu0 %v40
    %v244 = vpop.f32.mrb[0].mxu0
    %v245 = vadd.f32 0.0, %v244
    %v246 = vpop.f32.mrb[0].mxu0
    %247 = vdwg.mxu0
    %v248 = vmul.f32 %v133, 0.5
    %v249 = vmul.f32 %v138, 0.5
    %v250 = vmul.f32 %v133, 0.044715
    %v251 = vmul.f32 %v138, 0.044715
    %v252 = vmul.f32 %v250, %v133
    %v253 = vmul.f32 %v251, %v138
    %v254 = vmul.f32 %v252, %v133
    %v255 = vmul.f32 %v253, %v138
    %v256 = vadd.f32 %v133, %v254
    %v257 = vadd.f32 %v138, %v255
    %v258 = vmul.f32 %v256, 0.7978846
    %v259 = vmul.f32 %v257, 0.7978846
    %v260 = vtanh.pop %v258
    %v261 = vtanh.pop %v259
    %v262 = vadd.f32 %v260, 1.0
    %v263 = vadd.f32 %v261, 1.0
    %v264 = vmul.f32 %v248, %v262
    %v265 = vmul.f32 %v249, %v263
    %v266 = vmul.f32 %v264, %v240
    %v267 = vmul.f32 %v265, %v245
    %v268 = vld [vmem:[#allocation2] sm:$0xff]
    %v269 = vld [vmem:[#allocation2 + $0x8] sm:$0xff]
    %v270 = vld [vmem:[%s3] sm:$0xff]
    %v271 = vld [vmem:[%s3 + $0x8] sm:$0xff]
    %v272 = vld [vmem:[%s3 + $0x10] sm:$0xff]
    %v273 = vld [vmem:[%s3 + $0x18] sm:$0xff]
    %v274 = vld [vmem:[%s3 + $0x20] sm:$0xff]
    %v275 = vld [vmem:[%s3 + $0x28] sm:$0xff]
    %v276 = vld [vmem:[%s3 + $0x30] sm:$0xff]
    %v277 = vld [vmem:[%s3 + $0x38] sm:$0xff]
    %vm278 = vcmask 523264
    %v280 = vsel %vm278, %v266, 0
    %v283 = vsel %vm278, %v267, 0
    %285 = vmatprep.subr.mxu0 0.0
    %286 = vmatpush1.msra.mxu0 %v270
    %287 = vmatprep.subr.mxu0 0.0
    %288 = vmatpush1.msra.mxu0 %v271
    %289 = vmatprep.subr.mxu0 0.0
    %290 = vmatpush1.msra.mxu0 %v272
    %291 = vmatprep.subr.mxu0 0.0
    %292 = vmatpush1.msra.mxu0 %v273
    %293 = vmatprep.subr.mxu0 0.0
    %294 = vmatpush1.msra.mxu0 %v274
    %295 = vmatprep.subr.mxu0 0.0
    %296 = vmatpush1.msra.mxu0 %v275
    %297 = vmatprep.subr.mxu0 0.0
    %298 = vmatpush1.msra.mxu0 %v276
    %299 = vmatprep.subr.mxu0 0.0
    %300 = vmatpush1.msra.mxu0 %v277
    %301 = vmatprep.subr.mxu0 0.0
    %302 = vmatpush1.msra.mxu0 0.0
    %303 = vmatprep.subr.mxu0 0.0
    %304 = vmatpush1.msra.mxu0 0.0
    %305 = vmatprep.subr.mxu0 0.0
    %306 = vmatpush1.msra.mxu0 0.0
    %307 = vmatprep.subr.mxu0 0.0
    %308 = vmatpush1.msra.mxu0 0.0
    %309 = vmatprep.subr.mxu0 0.0
    %310 = vmatpush1.msra.mxu0 0.0
    %311 = vmatprep.subr.mxu0 0.0
    %312 = vmatpush1.msra.mxu0 0.0
    %313 = vmatprep.subr.mxu0 0.0
    %314 = vmatpush1.msra.mxu0 0.0
    %315 = vmatprep.subr.mxu0 0.0
    %316 = vmatpush1.msra.mxu0 0.0
    %317 = vmatprep.subr.mxu0 0.0
    %318 = vmatpush1.msra.mxu0 0.0
    %319 = vmatprep.subr.mxu0 0.0
    %320 = vmatpush1.msra.mxu0 0.0
    %321 = vmatprep.subr.mxu0 0.0
    %322 = vmatpush1.msra.mxu0 0.0
    %323 = vmatprep.subr.mxu0 0.0
    %324 = vmatpush1.msra.mxu0 0.0
    %325 = vmatprep.subr.mxu0 0.0
    %326 = vmatpush1.msra.mxu0 0.0
    %327 = vmatprep.subr.mxu0 0.0
    %328 = vmatpush1.msra.mxu0 0.0
    %329 = vmatprep.subr.mxu0 0.0
    %330 = vmatpush1.msra.mxu0 0.0
    %331 = vmatprep.subr.mxu0 0.0
    %332 = vmatpush1.msra.mxu0 0.0
    %333 = vmatprep.subr.mxu0 0.0
    %334 = vmatpush1.msra.mxu0 0.0
    %335 = vmatprep.subr.mxu0 0.0
    %336 = vmatpush1.msra.mxu0 0.0
    %337 = vmatprep.subr.mxu0 0.0
    %338 = vmatpush1.msra.mxu0 0.0
    %339 = vmatprep.subr.mxu0 0.0
    %340 = vmatpush1.msra.mxu0 0.0
    %341 = vmatprep.subr.mxu0 0.0
    %342 = vmatpush1.msra.mxu0 0.0
    %343 = vmatprep.subr.mxu0 0.0
    %344 = vmatpush1.msra.mxu0 0.0
    %345 = vmatprep.subr.mxu0 0.0
    %346 = vmatpush1.msra.mxu0 0.0
    %347 = vmatprep.subr.mxu0 0.0
    %348 = vmatpush1.msra.mxu0 0.0
    %349 = vmatprep.mubr.f32.mxu0 0.0
    %350 = vmatmul.mubr.f32.gmra.mrb[0].mxu0 %v280
    %v351 = vpop.f32.mrb[0].mxu0
    %v352 = vadd.f32 0.0, %v351
    %v353 = vpop.f32.mrb[0].mxu0
    %354 = vmatprep.mubr.f32.mxu0 0.0
    %355 = vmatmul.mubr.f32.gmra.mrb[0].mxu0 %v283
    %v356 = vpop.f32.mrb[0].mxu0
    %v357 = vadd.f32 0.0, %v356
    %v358 = vpop.f32.mrb[0].mxu0
    %359 = vdwg.mxu0
    %v360 = vadd.f32 %v268, %v352
    %v361 = vadd.f32 %v269, %v357
    %362 = vst.msk [vmem:[#allocation2] sm:$0xff] %vm35, %v360
    %363 = vst.msk [vmem:[#allocation2 + $0x8] sm:$0xff] %vm35, %v361
    // Predicated region
    $region22: #{tpu_custom_call.1} parent=1 // pred_check
      %p364 = pneg %p18
    $region23: #{tpu_custom_call.1} parent=1 // pred_check_branch
      %366 = sbr.rel (%p364) target = $region25
    $region24: #{tpu_custom_call.1} parent=1 // pred_region
      %v367 = vld [vmem:[#allocation2] sm:$0xff]
      %v368 = vld [vmem:[#allocation2 + $0x8] sm:$0xff]
      %369 = vst.msk [vmem:[#allocation3] sm:$0xff] %vm35, %v367
      %370 = vst.msk [vmem:[#allocation3 + $0x8] sm:$0xff] %vm35, %v368
    $region25: #{tpu_custom_call.1} parent=1 // pred_fallthru
      _
    // Predicated region
    $region26: #{tpu_custom_call.1} parent=1 // pred_check
      _
    $region27: #{tpu_custom_call.1} parent=1 // pred_check_branch
      %372 = sbr.rel (0) target = $region29
    $region28: #{tpu_custom_call.1} parent=1 // pred_region
      %s374 = ssub.s32 256, 256
      %375 = vsyncadd [#allocation4], %s374
      %s376 = sshll.u32 [#allocation3], 4
      %s377 = int_to_ptr.vmem [resolvable:$true] %s376
      %382 = dma.vmem_to_hbm [thread:$0]  %s377, 256, %s4, [#allocation4], 128, 128, 8
    $region29: #{tpu_custom_call.1} parent=1 // pred_fallthru
      _
    // Predicated region
    $region30: #{tpu_custom_call.1} parent=1 // pred_check
      _
    $region31: #{tpu_custom_call.1} parent=1 // pred_check_branch
      %384 = sbr.rel (0) target = $region33
    $region32: #{tpu_custom_call.1} parent=1 // pred_region
      %385 = dma.done [#allocation4], 256
    $region33: #{tpu_custom_call.1} parent=1 // pred_fallthru
      _
    %386 = vsyncpa [#allocation4], 1

</llo_original>
